<compile_context>
chip_gen: v5e
topology: v5e:2x2
jax: 0.10.0
libtpu: 0.0.40
codegen_flags: <defaults>
</compile_context>

<pallas_src>
import functools

import jax
import jax.numpy as jnp
from jax import lax
from jax.experimental import pallas as pl
from jax.experimental.pallas import tpu as pltpu

_MIB = 1024 * 1024


def _sublane(itemsize):
    """Second-to-last-dim packing unit for a given element size."""
    return {4: 8, 2: 16, 1: 32}.get(itemsize, 8)


def _pick_q_tile(lq, sub, preferred):
    """Pick the Lq tile.

    Returns (tq, exact).  Prefers the largest divisor of lq that is <=
    `preferred` and a multiple of `sub` (all divisors searched, not just
    powers of two).  If lq <= preferred the whole axis is one tile (a block
    dim equal to the full array dim is always legal).  If no aligned divisor
    exists, returns a `sub`-aligned tile with exact=False and the caller uses
    a cdiv grid (the padded tail rows are independent and their writes are
    dropped, so this is safe).
    """
    if lq <= preferred:
        return lq, True
    top = (min(preferred, lq) // sub) * sub
    for t in range(top, sub - 1, -sub):
        if lq % t == 0:
            return t, True
    return max(sub, top), False


def _sdpa_kernel(q_ref, k_ref, v_ref, *rest, inv_scale, mask_mode, approx_recip):
    """One (batch, Lq-tile) grid step: exact softmax over the full Lk axis."""
    if mask_mode == "none":
        attn_ref, out_ref = rest
        mask = None
    else:
        mask_ref, attn_ref, out_ref = rest
        mask = mask_ref[...]

    q = q_ref[...]           # (tq, Dk)
    k = k_ref[...]           # (Lk, Dk) -- consumed as stored ('qd,kd->qk')
    v = v_ref[...]           # (Lk, Dv)

    u = lax.dot_general(q, k, (((1,), (1,)), ((), ())),
                        preferred_element_type=jnp.float32)
    u = u * jnp.float32(inv_scale)          # scale the f32 logits (exact)

    if mask_mode == "bool":
        u = jnp.where(mask != 0, -jnp.inf, u)   # matches torch masked_fill(-inf)
    elif mask_mode == "bias":
        u = u + mask.astype(jnp.float32)        # additive bias: 0 keep, -inf mask

    # NOTE: fully-masked rows give exp(-inf - (-inf)) = NaN, matching
    # torch masked_fill(-inf) + softmax semantics.
    u_max = jnp.max(u, axis=-1, keepdims=True)
    e = jnp.exp(u - u_max)
    denom = jnp.sum(e, axis=-1, keepdims=True)
    attn = e * pl.reciprocal(denom, approx=approx_recip)

    attn_ref[...] = attn.astype(attn_ref.dtype)
    out = jnp.dot(attn.astype(v.dtype), v, preferred_element_type=jnp.float32)
    out_ref[...] = out.astype(out_ref.dtype)


def scaled_dot_product_attention(q, k, v, scale, mask=None, attn_dtype=None):
    """Pallas implementation of ScaledDotProductAttention.forward.

    q: (B, Lq, Dk), k: (B, Lk, Dk), v: (B, Lk, Dv)
    mask: optional (B, Lq, Lk).  bool / int => True/nonzero is masked to -inf;
          float => treated as an additive bias (0 keeps, -inf masks).
    attn_dtype: dtype of the returned attention matrix (default q.dtype);
          pass jnp.bfloat16 to halve the dominant HBM writeback stream.
    Returns (attn, output) with shapes (B, Lq, Lk) and (B, Lq, Dv).
    """
    B, Lq, Dk = q.shape
    _, Lk, _ = k.shape
    Dv = v.shape[-1]

    out_dtype = q.dtype
    attn_dtype = jnp.dtype(out_dtype if attn_dtype is None else attn_dtype)
    in_isz = jnp.dtype(q.dtype).itemsize
    attn_isz = attn_dtype.itemsize
    out_isz = jnp.dtype(out_dtype).itemsize
    sub = _sublane(in_isz)

    # --- mask normalization (avoid a full HBM repack when already 1 byte) ---
    mask_mode, mask_in, mask_isz = "none", None, 0
    if mask is not None:
        mdt = jnp.dtype(mask.dtype)
        if jnp.issubdtype(mdt, jnp.floating):
            mask_mode, mask_in, mask_isz = "bias", mask, mdt.itemsize
        elif mdt == jnp.dtype(jnp.bool_):
            # byte-for-byte convert only (no compare pass)
            mask_mode, mask_in, mask_isz = "bool", mask.astype(jnp.int8), 1
        elif mdt.itemsize == 1:
            mask_mode, mask_in, mask_isz = "bool", mask, 1
        else:
            mask_mode, mask_in, mask_isz = "bool", (mask != 0).astype(jnp.int8), 1

    # --- generation-aware VMEM budget (v5e/v6e: 128 MiB, v7x: 64 MiB/TC) ---
    try:
        phys = int(pltpu.get_tpu_info().vmem_capacity_bytes)
    except Exception:  # conservative fallback (v7x-sized)
        phys = 64 * _MIB
    budget = max(32 * _MIB, phys - 16 * _MIB)  # headroom for Mosaic scratch

    def footprint(tq):
        """Double-buffered I/O streams + live f32 softmax slabs for one tile."""
        mask_b = 2 * tq * Lk * mask_isz if mask_in is not None else 0
        return (2 * tq * Dk * in_isz        # q
                + 2 * Lk * Dk * in_isz      # k (resident; block idx const over i)
                + 2 * Lk * Dv * in_isz      # v
                + mask_b
                + 2 * tq * Lk * attn_isz    # attn writeback
                + 2 * tq * Dv * out_isz     # output
                + 3 * tq * Lk * 4)          # u / e / attn f32 temporaries

    # Larger resident tiles push the mem-bound kernel toward the HBM roofline;
    # shrink the preferred tile until the footprint fits the budget.
    preferred = 512 if budget >= 96 * _MIB else 256
    pref = max(sub, (preferred // sub) * sub)
    while True:
        tq, exact = _pick_q_tile(Lq, sub, pref)
        if footprint(tq) <= budget or pref <= sub:
            break
        pref = max(sub, pref // 2)
    # TODO(synk): if footprint(tq) still exceeds budget here (huge Lk), the
    # planned two-pass Lk-tiled variant should take over.

    grid = (B, (Lq // tq) if exact else pl.cdiv(Lq, tq))
    vmem_limit = int(min(budget, max(32 * _MIB, footprint(tq) + 8 * _MIB)))
    inv_scale = 1.0 / float(scale)
    approx_recip = attn_isz < 4 and out_isz < 4  # EUP recip only for sub-f32 outputs

    # Leading batch dim squeezed (None) so kernel refs are 2-D tiles.
    q_spec = pl.BlockSpec((None, tq, Dk), lambda b, i: (b, i, 0))
    k_spec = pl.BlockSpec((None, Lk, Dk), lambda b, i: (b, 0, 0))
    v_spec = pl.BlockSpec((None, Lk, Dv), lambda b, i: (b, 0, 0))
    attn_spec = pl.BlockSpec((None, tq, Lk), lambda b, i: (b, i, 0))
    out_spec = pl.BlockSpec((None, tq, Dv), lambda b, i: (b, i, 0))

    in_specs = [q_spec, k_spec, v_spec]
    args = [q, k, v]
    if mask_in is not None:
        in_specs.append(pl.BlockSpec((None, tq, Lk), lambda b, i: (b, i, 0)))
        args.append(mask_in)

    flops = 2 * B * Lq * Lk * (Dk + Dv)
    transcendentals = B * Lq * Lk
    bytes_accessed = (in_isz * (B * Lq * Dk + B * Lk * Dk + B * Lk * Dv)
                      + attn_isz * B * Lq * Lk
                      + out_isz * B * Lq * Dv
                      + (mask_isz * B * Lq * Lk if mask_in is not None else 0))

    kernel = functools.partial(_sdpa_kernel, inv_scale=inv_scale,
                               mask_mode=mask_mode, approx_recip=approx_recip)

    attn, out = pl.pallas_call(
        kernel,
        out_shape=(
            jax.ShapeDtypeStruct((B, Lq, Lk), attn_dtype),
            jax.ShapeDtypeStruct((B, Lq, Dv), out_dtype),
        ),
        grid_spec=pltpu.PrefetchScalarGridSpec(
            num_scalar_prefetch=0,
            grid=grid,
            in_specs=in_specs,
            out_specs=[attn_spec, out_spec],
        ),
        compiler_params=pltpu.CompilerParams(
            dimension_semantics=("parallel", "parallel"),
            vmem_limit_bytes=vmem_limit,
        ),
        cost_estimate=pl.CostEstimate(
            flops=flops,
            transcendentals=transcendentals,
            bytes_accessed=bytes_accessed,
        ),
    )(*args)
    return attn, out


def _reference(q, k, v, scale, mask=None):
    u = jnp.einsum("bqd,bkd->bqk", q, k) / scale
    if mask is not None:
        u = jnp.where(mask, -jnp.inf, u)
    attn = jax.nn.softmax(u, axis=2)
    out = jnp.einsum("bqk,bkd->bqd", attn, v)
    return attn, out


if __name__ == "__main__":
    key = jax.random.PRNGKey(0)
    kq, kk, kv = jax.random.split(key, 3)

    B, Lq, Lk, Dk, Dv = 2, 8, 8, 32, 32
    scale = float(Dk) ** 0.5  # typical sqrt(d_k) scaling passed to __init__

    q = jax.random.normal(kq, (B, Lq, Dk), dtype=jnp.float32)
    k = jax.random.normal(kk, (B, Lk, Dk), dtype=jnp.float32)
    v = jax.random.normal(kv, (B, Lk, Dv), dtype=jnp.float32)

    # --- mask=None path (dedicated kernel, no mask stream) ---
    attn, out = scaled_dot_product_attention(q, k, v, scale, mask=None)
    jax.block_until_ready((attn, out))
    ref_attn, ref_out = _reference(q, k, v, scale, None)
    assert jnp.allclose(attn, ref_attn, atol=2e-5, rtol=2e-5)
    assert jnp.allclose(out, ref_out, atol=2e-5, rtol=2e-5)

    # --- boolean mask path (causal: no fully-masked rows, so no NaNs) ---
    row = jnp.arange(Lq)[:, None]
    col = jnp.arange(Lk)[None, :]
    mask = jnp.broadcast_to(col > row, (B, Lq, Lk))
    attn_m, out_m = scaled_dot_product_attention(q, k, v, scale, mask=mask)
    jax.block_until_ready((attn_m, out_m))
    ref_attn_m, ref_out_m = _reference(q, k, v, scale, mask)
    assert jnp.allclose(attn_m, ref_attn_m, atol=2e-5, rtol=2e-5)
    assert jnp.allclose(out_m, ref_out_m, atol=2e-5, rtol=2e-5)

    # --- additive-bias mask path (float mask: 0 keeps, -inf masks) ---
    bias = jnp.where(mask, -jnp.inf, 0.0).astype(jnp.float32)
    attn_b, out_b = scaled_dot_product_attention(q, k, v, scale, mask=bias)
    jax.block_until_ready((attn_b, out_b))
    assert jnp.allclose(attn_b, ref_attn_m, atol=2e-5, rtol=2e-5)
    assert jnp.allclose(out_b, ref_out_m, atol=2e-5, rtol=2e-5)

    # --- bf16 attention-output option (halves the dominant writeback) ---
    attn_bf, out_bf = scaled_dot_product_attention(q, k, v, scale, mask=mask,
                                                   attn_dtype=jnp.bfloat16)
    jax.block_until_ready((attn_bf, out_bf))
    assert jnp.allclose(attn_bf.astype(jnp.float32), ref_attn_m, atol=1e-2)
    assert jnp.allclose(out_bf, ref_out_m, atol=2e-5, rtol=2e-5)

    print("KERNEL_OK")
</pallas_src>

<mosaic_0001>
module attributes {stable_mosaic.version = 11 : i64} {
  func.func @_sdpa_kernel(%arg0: i32, %arg1: i32, %arg2: memref<1x8x32xf32, #tpu.memory_space<vmem>>, %arg3: memref<1x8x32xf32, #tpu.memory_space<vmem>>, %arg4: memref<1x8x32xf32, #tpu.memory_space<vmem>>, %arg5: memref<1x8x8xf32, #tpu.memory_space<vmem>>, %arg6: memref<1x8x32xf32, #tpu.memory_space<vmem>>) attributes {dimension_semantics = [#tpu.dimension_semantics<parallel>, #tpu.dimension_semantics<parallel>], iteration_bounds = array<i64: 2, 1>, scalar_prefetch = 0 : i64, scratch_operands = 0 : i64, tpu.core_type = #tpu.core_type<tc>, window_params = [{transform_indices = @transform_0, window_bounds = array<i64: 1, 8, 32>}, {transform_indices = @transform_1, window_bounds = array<i64: 1, 8, 32>}, {transform_indices = @transform_2, window_bounds = array<i64: 1, 8, 32>}, {transform_indices = @transform_3, window_bounds = array<i64: 1, 8, 8>}, {transform_indices = @transform_4, window_bounds = array<i64: 1, 8, 32>}]} {
    %c0 = arith.constant 0 : index
    %c0_0 = arith.constant 0 : index
    %c0_1 = arith.constant 0 : index
    %0 = vector.load %arg2[%c0, %c0_0, %c0_1] : memref<1x8x32xf32, #tpu.memory_space<vmem>>, vector<1x8x32xf32>
    %1 = vector.shape_cast %0 : vector<1x8x32xf32> to vector<8x32xf32>
    %c0_2 = arith.constant 0 : index
    %c0_3 = arith.constant 0 : index
    %c0_4 = arith.constant 0 : index
    %2 = vector.load %arg3[%c0_2, %c0_3, %c0_4] : memref<1x8x32xf32, #tpu.memory_space<vmem>>, vector<1x8x32xf32>
    %3 = vector.shape_cast %2 : vector<1x8x32xf32> to vector<8x32xf32>
    %c0_5 = arith.constant 0 : index
    %c0_6 = arith.constant 0 : index
    %c0_7 = arith.constant 0 : index
    %4 = vector.load %arg4[%c0_5, %c0_6, %c0_7] : memref<1x8x32xf32, #tpu.memory_space<vmem>>, vector<1x8x32xf32>
    %5 = vector.shape_cast %4 : vector<1x8x32xf32> to vector<8x32xf32>
    %cst = arith.constant dense<0.000000e+00> : vector<8x8xf32>
    %6 = tpu.matmul %1, %3, %cst {dimension_numbers = #tpu.dot_dimension_numbers<[1], [1], [0], [0], [0, 0, 1, 0], [], []>} : vector<8x32xf32>, vector<8x32xf32>, vector<8x8xf32> -> vector<8x8xf32>
    %cst_8 = arith.constant 0.176776692 : f32
    %7 = vector.broadcast %cst_8 : f32 to vector<8x8xf32>
    %8 = arith.mulf %6, %7 : vector<8x8xf32>
    %cst_9 = arith.constant dense<0xFF800000> : vector<8xf32>
    %9 = vector.multi_reduction <maximumf>, %8, %cst_9 [1] : vector<8x8xf32> to vector<8xf32>
    %10 = vector.shape_cast %9 : vector<8xf32> to vector<8x1xf32>
    %11 = vector.broadcast %10 : vector<8x1xf32> to vector<8x8xf32>
    %12 = arith.subf %8, %11 : vector<8x8xf32>
    %13 = math.exp %12 : vector<8x8xf32>
    %cst_10 = arith.constant dense<0.000000e+00> : vector<8xf32>
    %14 = vector.multi_reduction <add>, %13, %cst_10 [1] : vector<8x8xf32> to vector<8xf32>
    %15 = vector.shape_cast %14 : vector<8xf32> to vector<8x1xf32>
    %16 = tpu.reciprocal %15 : vector<8x1xf32> -> vector<8x1xf32>
    %17 = vector.broadcast %16 : vector<8x1xf32> to vector<8x8xf32>
    %18 = arith.mulf %13, %17 : vector<8x8xf32>
    %c0_11 = arith.constant 0 : index
    %c0_12 = arith.constant 0 : index
    %c0_13 = arith.constant 0 : index
    %19 = vector.load %arg5[%c0_11, %c0_12, %c0_13] : memref<1x8x8xf32, #tpu.memory_space<vmem>>, vector<1x8x8xf32>
    %20 = vector.shape_cast %19 : vector<1x8x8xf32> to vector<8x8xf32>
    %21 = vector.shape_cast %18 : vector<8x8xf32> to vector<1x8x8xf32>
    tpu.vector_store %arg5[%c0_11, %c0_12, %c0_13], %21 {strides = array<i32>} : memref<1x8x8xf32, #tpu.memory_space<vmem>>, vector<1x8x8xf32>,
    %cst_14 = arith.constant dense<0.000000e+00> : vector<8x32xf32>
    %22 = tpu.matmul %18, %5, %cst_14 {dimension_numbers = #tpu.dot_dimension_numbers<[1], [0], [0], [1], [0, 0, 1, 1], [], []>} : vector<8x8xf32>, vector<8x32xf32>, vector<8x32xf32> -> vector<8x32xf32>
    %c0_15 = arith.constant 0 : index
    %c0_16 = arith.constant 0 : index
    %c0_17 = arith.constant 0 : index
    %23 = vector.load %arg6[%c0_15, %c0_16, %c0_17] : memref<1x8x32xf32, #tpu.memory_space<vmem>>, vector<1x8x32xf32>
    %24 = vector.shape_cast %23 : vector<1x8x32xf32> to vector<8x32xf32>
    %25 = vector.shape_cast %22 : vector<8x32xf32> to vector<1x8x32xf32>
    tpu.vector_store %arg6[%c0_15, %c0_16, %c0_17], %25 {strides = array<i32>} : memref<1x8x32xf32, #tpu.memory_space<vmem>>, vector<1x8x32xf32>,
    return
  }
  func.func @transform_0(%arg0: i32, %arg1: i32) -> (i32, i32, i32) {
    %c0_i32 = arith.constant 0 : i32
    %c0_i32_0 = arith.constant 0 : i32
    return %arg0, %arg1, %c0_i32 : i32, i32, i32
  }
  func.func @transform_1(%arg0: i32, %arg1: i32) -> (i32, i32, i32) {
    %c0_i32 = arith.constant 0 : i32
    %c0_i32_0 = arith.constant 0 : i32
    %c0_i32_1 = arith.constant 0 : i32
    return %arg0, %c0_i32, %c0_i32_0 : i32, i32, i32
  }
  func.func @transform_2(%arg0: i32, %arg1: i32) -> (i32, i32, i32) {
    %c0_i32 = arith.constant 0 : i32
    %c0_i32_0 = arith.constant 0 : i32
    %c0_i32_1 = arith.constant 0 : i32
    return %arg0, %c0_i32, %c0_i32_0 : i32, i32, i32
  }
  func.func @transform_3(%arg0: i32, %arg1: i32) -> (i32, i32, i32) {
    %c0_i32 = arith.constant 0 : i32
    %c0_i32_0 = arith.constant 0 : i32
    return %arg0, %arg1, %c0_i32 : i32, i32, i32
  }
  func.func @transform_4(%arg0: i32, %arg1: i32) -> (i32, i32, i32) {
    %c0_i32 = arith.constant 0 : i32
    %c0_i32_0 = arith.constant 0 : i32
    return %arg0, %arg1, %c0_i32 : i32, i32, i32
  }
}

</mosaic_0001>

<llo_original>
// kernel: tpu_custom_call.1
$region0: #{tpu_custom_call.1}
  #allocation0 [shape = 'u32[]', space=smem, size = 0x4, offset = 0x4, fixed_abs, tag = 'smem constant byte address 0x4 - core index']
  #allocation1 [shape = 'u32[72,128]{1,0:T(1,128)}', space=vmem, size = 0x9000, scoped, tag = 'internal scratch']
  %s0 = inlined_call_operand.hbm [shape: f32[2,8,32], index: 0, kind: input, shape index: {}]
  %s1 = inlined_call_operand.hbm [shape: f32[2,8,32], index: 1, kind: input, shape index: {}]
  %s2 = inlined_call_operand.hbm [shape: f32[2,8,32], index: 2, kind: input, shape index: {}]
  %s3 = inlined_call_operand.hbm [shape: f32[2,8,8], index: 3, kind: output, shape index: {0}]
  %s4 = inlined_call_operand.hbm [shape: f32[2,8,32], index: 4, kind: output, shape index: {1}]
  %5 = xla_tuple %s3, %s4
  %s6 = sld [smem:[#allocation0]]
  $region65: #{tpu_custom_call.1} parent=0
    _
  %s8 = ssub.s32 1, %s6
  %s9 = scalar_select 0, %s8, %s6
  $region1: #{tpu_custom_call.1} parent=0
    #allocation2 [shape = 'u8[8192]{0}', space=vmem, size = 0x2000, scoped, tag = 'input window, operand 0']
    #allocation3 [shape = 's32[2]{0}', space=sflag, size = 0x8, scoped, tag = 'scoped memory for tpu_custom_call.1']
    #allocation4 [shape = 's32[2]{0}', space=sflag, size = 0x8, scoped, tag = 'scoped memory for tpu_custom_call.1']
    #allocation5 [shape = 'u8[8192]{0}', space=vmem, size = 0x2000, scoped, tag = 'input window, operand 1']
    #allocation6 [shape = 's32[2]{0}', space=sflag, size = 0x8, scoped, tag = 'scoped memory for tpu_custom_call.1']
    #allocation7 [shape = 'u8[8192]{0}', space=vmem, size = 0x2000, scoped, tag = 'input window, operand 2']
    #allocation8 [shape = 'u8[8192]{0}', space=vmem, size = 0x2000, scoped, tag = 'output window, operand 0']
    #allocation9 [shape = 'u8[8192]{0}', space=vmem, size = 0x2000, scoped, tag = 'output window, operand 1']
    #allocation10 [shape = 's32[2]{0}', space=sflag, size = 0x8, scoped, tag = 'scoped memory for tpu_custom_call.1']
    %10 = vsyncpa [#allocation3], 0
    %s11 = scalar_lea.sflag [#allocation3], 1
    %12 = vsyncpa %s11, 0
    %13 = vsyncpa [#allocation6], 0
    %s14 = scalar_lea.sflag [#allocation6], 1
    %15 = vsyncpa %s14, 0
    %16 = vsyncpa [#allocation4], 0
    %s17 = scalar_lea.sflag [#allocation4], 1
    %18 = vsyncpa %s17, 0
    %19 = vsyncpa [#allocation10], 0
    %s20 = scalar_lea.sflag [#allocation10], 1
    %21 = vsyncpa %s20, 0
    loop: start=0, step=1, limit=4
    $region2: #{tpu_custom_call.1} parent=1 // loop_pre_header
      _
    $region3: #{tpu_custom_call.1} parent=1 // loop_header
      %s23 = sphi 0, %s27
      %p24 = scmp.ge.s32.totalorder %s23, 4
      %s30 = sphi 0, %s42
      %s31 = sphi 0, %s38
      %s32 = sphi 0, %s30
      %s33 = sphi 0, %s31
      %s34 = sphi 0, %s32
      %s35 = sphi 0, %s33
      %s47 = sphi 0, %s49
      %s50 = sphi 0, %s47
      %s51 = sphi 0, %s50
      %s67 = sphi 0, %s51
      %s73 = sphi 0, %s75
      %s76 = sphi 0, %s73
      %s77 = sphi 0, %s76
      %s93 = sphi 0, %s77
      %s99 = sphi 0, %s101
      %s102 = sphi 0, %s99
      %s103 = sphi 0, %s102
      %s119 = sphi 0, %s103
      %s127 = sphi 0, %s129
      %s130 = sphi 0, %s127
      %s131 = sphi 0, %s130
      %s147 = sphi 0, %s131
      %s155 = sphi 0, %s157
      %s158 = sphi 0, %s155
      %s159 = sphi 0, %s158
      %s175 = sphi 0, %s159
    $region4: #{tpu_custom_call.1} parent=1 // loop_header_branch
      %26 = sbr.rel (%p24) target = $region8
    $region5: #{tpu_custom_call.1} parent=1 // loop_body
      %s28 = ssub.s32 %s23, 1
      %s29 = ssub.s32 %s23, 2
      %s36 = sadd.s32 1, %s31
      %p37 = scmp.ge.s32.totalorder %s36, 1
      %s38 = scalar_select %p37, 0, %s36
      %s39 = sadd.s32 1, %s30
      %s40 = scalar_select %p37, %s39, %s30
      %p41 = scmp.ge.s32.totalorder %s40, 2
      %s42 = scalar_select %p41, 0, %s40
      %s43 = ssub.s32 %s30, %s42
      %s44 = ssub.s32 %s31, %s38
      %s45 = sor.u32 %s43, %s44
      %p46 = scmp.eq.s32.totalorder %s45, 0
      %s48 = sadd.s32 %s47, 1
      %s49 = scalar_select %p46, %s47, %s48
      %p52 = pneg %p46
      %p53 = scmp.eq.s32.totalorder %s23, 1
      %p54 = por %p52, %p53
      %p55 = scmp.ne.s32.totalorder %s47, %s50
      %p56 = scmp.eq.s32.totalorder %s23, 0
      %p57 = por %p55, %p56
      %p58 = scmp.ne.s32.totalorder %s47, %s50
      %p59 = scmp.eq.s32.totalorder %s28, 1
      %p60 = por %p58, %p59
      %p61 = scmp.ne.s32.totalorder %s50, %s51
      %p62 = scmp.eq.s32.totalorder %s28, 0
      %p63 = por %p61, %p62
      %p64 = scmp.ne.s32.totalorder %s50, %s51
      %p65 = scmp.eq.s32.totalorder %s29, 1
      %p66 = por %p64, %p65
      %p68 = scmp.ne.s32.totalorder %s51, %s67
      %p69 = scmp.eq.s32.totalorder %s29, 0
      %p70 = por %p68, %p69
      %s71 = ssub.s32 %s30, %s42
      %p72 = scmp.eq.s32.totalorder %s71, 0
      %s74 = sadd.s32 %s73, 1
      %s75 = scalar_select %p72, %s73, %s74
      %p78 = pneg %p72
      %p79 = scmp.eq.s32.totalorder %s23, 1
      %p80 = por %p78, %p79
      %p81 = scmp.ne.s32.totalorder %s73, %s76
      %p82 = scmp.eq.s32.totalorder %s23, 0
      %p83 = por %p81, %p82
      %p84 = scmp.ne.s32.totalorder %s73, %s76
      %p85 = scmp.eq.s32.totalorder %s28, 1
      %p86 = por %p84, %p85
      %p87 = scmp.ne.s32.totalorder %s76, %s77
      %p88 = scmp.eq.s32.totalorder %s28, 0
      %p89 = por %p87, %p88
      %p90 = scmp.ne.s32.totalorder %s76, %s77
      %p91 = scmp.eq.s32.totalorder %s29, 1
      %p92 = por %p90, %p91
      %p94 = scmp.ne.s32.totalorder %s77, %s93
      %p95 = scmp.eq.s32.totalorder %s29, 0
      %p96 = por %p94, %p95
      %s97 = ssub.s32 %s30, %s42
      %p98 = scmp.eq.s32.totalorder %s97, 0
      %s100 = sadd.s32 %s99, 1
      %s101 = scalar_select %p98, %s99, %s100
      %p104 = pneg %p98
      %p105 = scmp.eq.s32.totalorder %s23, 1
      %p106 = por %p104, %p105
      %p107 = scmp.ne.s32.totalorder %s99, %s102
      %p108 = scmp.eq.s32.totalorder %s23, 0
      %p109 = por %p107, %p108
      %p110 = scmp.ne.s32.totalorder %s99, %s102
      %p111 = scmp.eq.s32.totalorder %s28, 1
      %p112 = por %p110, %p111
      %p113 = scmp.ne.s32.totalorder %s102, %s103
      %p114 = scmp.eq.s32.totalorder %s28, 0
      %p115 = por %p113, %p114
      %p116 = scmp.ne.s32.totalorder %s102, %s103
      %p117 = scmp.eq.s32.totalorder %s29, 1
      %p118 = por %p116, %p117
      %p120 = scmp.ne.s32.totalorder %s103, %s119
      %p121 = scmp.eq.s32.totalorder %s29, 0
      %p122 = por %p120, %p121
      %s123 = ssub.s32 %s30, %s42
      %s124 = ssub.s32 %s31, %s38
      %s125 = sor.u32 %s123, %s124
      %p126 = scmp.eq.s32.totalorder %s125, 0
      %s128 = sadd.s32 %s127, 1
      %s129 = scalar_select %p126, %s127, %s128
      %p132 = pneg %p126
      %p133 = scmp.eq.s32.totalorder %s23, 1
      %p134 = por %p132, %p133
      %p135 = scmp.ne.s32.totalorder %s127, %s130
      %p136 = scmp.eq.s32.totalorder %s23, 0
      %p137 = por %p135, %p136
      %p138 = scmp.ne.s32.totalorder %s127, %s130
      %p139 = scmp.eq.s32.totalorder %s28, 1
      %p140 = por %p138, %p139
      %p141 = scmp.ne.s32.totalorder %s130, %s131
      %p142 = scmp.eq.s32.totalorder %s28, 0
      %p143 = por %p141, %p142
      %p144 = scmp.ne.s32.totalorder %s130, %s131
      %p145 = scmp.eq.s32.totalorder %s29, 1
      %p146 = por %p144, %p145
      %p148 = scmp.ne.s32.totalorder %s131, %s147
      %p149 = scmp.eq.s32.totalorder %s29, 0
      %p150 = por %p148, %p149
      %s151 = ssub.s32 %s30, %s42
      %s152 = ssub.s32 %s31, %s38
      %s153 = sor.u32 %s151, %s152
      %p154 = scmp.eq.s32.totalorder %s153, 0
      %s156 = sadd.s32 %s155, 1
      %s157 = scalar_select %p154, %s155, %s156
      %p160 = pneg %p154
      %p161 = scmp.eq.s32.totalorder %s23, 1
      %p162 = por %p160, %p161
      %p163 = scmp.ne.s32.totalorder %s155, %s158
      %p164 = scmp.eq.s32.totalorder %s23, 0
      %p165 = por %p163, %p164
      %p166 = scmp.ne.s32.totalorder %s155, %s158
      %p167 = scmp.eq.s32.totalorder %s28, 1
      %p168 = por %p166, %p167
      %p169 = scmp.ne.s32.totalorder %s158, %s159
      %p170 = scmp.eq.s32.totalorder %s28, 0
      %p171 = por %p169, %p170
      %p172 = scmp.ne.s32.totalorder %s158, %s159
      %p173 = scmp.eq.s32.totalorder %s29, 1
      %p174 = por %p172, %p173
      %p176 = scmp.ne.s32.totalorder %s159, %s175
      %p177 = scmp.eq.s32.totalorder %s29, 0
      %p178 = por %p176, %p177
      %p179 = scmp.le.s32.totalorder 1, %s23
      %p180 = scmp.lt.s32.totalorder %s23, 3
      %p181 = pnand %p179, %p180
      %p182 = pneg %p181
      // Predicated region
      $region9: #{tpu_custom_call.1} parent=5 // pred_check
        _
      $region10: #{tpu_custom_call.1} parent=5 // pred_check_branch
        %184 = sbr.rel (%p181) target = $region12
      $region11: #{tpu_custom_call.1} parent=5 // pred_region
        %s185 = ssub.s32 %s23, 1
      $region12: #{tpu_custom_call.1} parent=5 // pred_fallthru
        _
      %p186 = scmp.lt.s32.totalorder %s23, 2
      // Predicated region
      $region13: #{tpu_custom_call.1} parent=5 // pred_check
        %p187 = pneg %p186
      $region14: #{tpu_custom_call.1} parent=5 // pred_check_branch
        %189 = sbr.rel (%p187) target = $region16
      $region15: #{tpu_custom_call.1} parent=5 // pred_region
        // Predicated region
        $region17: #{tpu_custom_call.1} parent=15 // pred_check
          %p190 = pneg %p57
        $region18: #{tpu_custom_call.1} parent=15 // pred_check_branch
          %192 = sbr.rel (%p190) target = $region20
        $region19: #{tpu_custom_call.1} parent=15 // pred_region
          %s193 = sand.u32 %s47, 1
          %s194 = scalar_lea.sflag [#allocation3], %s193
          %s195 = sand.u32 %s47, 1
          %s196 = smul.addr %s195, 8
          %s197 = scalar_lea.vmem [#allocation2], %s196
          %199 = vsyncadd %s194, 0
          %s200 = sadd.s32 %s31, %s30
          %s201 = smul.addr %s200, 8
          %s202 = scalar_lea.hbm %s0, %s201
          %s204 = sshll.u32 %s202, 4
          %s205 = int_to_ptr.hbm [resolvable:$true] %s204
          %s206 = sshll.u32 %s197, 4
          %s207 = int_to_ptr.vmem [resolvable:$true] %s206
          %209 = dma.hbm_to_vmem [thread:$0]  %s205, 128, %s207, %s194
        $region20: #{tpu_custom_call.1} parent=15 // pred_fallthru
          _
        // Predicated region
        $region21: #{tpu_custom_call.1} parent=15 // pred_check
          %p210 = pneg %p83
        $region22: #{tpu_custom_call.1} parent=15 // pred_check_branch
          %212 = sbr.rel (%p210) target = $region24
        $region23: #{tpu_custom_call.1} parent=15 // pred_region
          %s213 = sand.u32 %s23, 1
          %s214 = scalar_lea.sflag [#allocation6], %s213
          %s215 = sand.u32 %s73, 1
          %s216 = smul.addr %s215, 8
          %s217 = scalar_lea.vmem [#allocation5], %s216
          %219 = vsyncadd %s214, 0
          %s220 = smul.addr %s30, 8
          %s221 = scalar_lea.hbm %s1, %s220
          %s223 = sshll.u32 %s221, 4
          %s224 = int_to_ptr.hbm [resolvable:$true] %s223
          %s225 = sshll.u32 %s217, 4
          %s226 = int_to_ptr.vmem [resolvable:$true] %s225
          %228 = dma.hbm_to_vmem [thread:$0]  %s224, 128, %s226, %s214
        $region24: #{tpu_custom_call.1} parent=15 // pred_fallthru
          _
        // Predicated region
        $region25: #{tpu_custom_call.1} parent=15 // pred_check
          %p229 = pneg %p109
        $region26: #{tpu_custom_call.1} parent=15 // pred_check_branch
          %231 = sbr.rel (%p229) target = $region28
        $region27: #{tpu_custom_call.1} parent=15 // pred_region
          %s232 = sand.u32 %s23, 1
          %s233 = scalar_lea.sflag [#allocation6], %s232
          %s234 = sand.u32 %s99, 1
          %s235 = smul.addr %s234, 8
          %s236 = scalar_lea.vmem [#allocation7], %s235
          %238 = vsyncadd %s233, 0
          %s239 = smul.addr %s30, 8
          %s240 = scalar_lea.hbm %s2, %s239
          %s242 = sshll.u32 %s240, 4
          %s243 = int_to_ptr.hbm [resolvable:$true] %s242
          %s244 = sshll.u32 %s236, 4
          %s245 = int_to_ptr.vmem [resolvable:$true] %s244
          %247 = dma.hbm_to_vmem [thread:$0]  %s243, 128, %s245, %s233
        $region28: #{tpu_custom_call.1} parent=15 // pred_fallthru
          _
      $region16: #{tpu_custom_call.1} parent=5 // pred_fallthru
        _
      %p248 = scmp.le.s32.totalorder 1, %s23
      %p249 = scmp.lt.s32.totalorder %s23, 3
      %p250 = pnand %p248, %p249
      %p251 = pneg %p250
      // Predicated region
      $region29: #{tpu_custom_call.1} parent=5 // pred_check
        _
      $region30: #{tpu_custom_call.1} parent=5 // pred_check_branch
        %253 = sbr.rel (%p250) target = $region32
      $region31: #{tpu_custom_call.1} parent=5 // pred_region
        %s254 = ssub.s32 %s23, 1
        %s255 = sand.u32 %s50, 1
        %s256 = scalar_lea.sflag [#allocation3], %s255
        %s257 = sand.u32 %s50, 1
        %s258 = smul.addr %s257, 8
        %s259 = scalar_lea.vmem [#allocation2], %s258
        // Predicated region
        $region33: #{tpu_custom_call.1} parent=31 // pred_check
          %p260 = pneg %p63
        $region34: #{tpu_custom_call.1} parent=31 // pred_check_branch
          %262 = sbr.rel (%p260) target = $region36
        $region35: #{tpu_custom_call.1} parent=31 // pred_region
          %264 = dma.done %s256, 128
        $region36: #{tpu_custom_call.1} parent=31 // pred_fallthru
          _
        %s265 = sand.u32 %s28, 1
        %s266 = scalar_lea.sflag [#allocation6], %s265
        %s267 = sand.u32 %s76, 1
        %s268 = smul.addr %s267, 8
        %s269 = scalar_lea.vmem [#allocation5], %s268
        // Predicated region
        $region37: #{tpu_custom_call.1} parent=31 // pred_check
          %p270 = pneg %p89
        $region38: #{tpu_custom_call.1} parent=31 // pred_check_branch
          %272 = sbr.rel (%p270) target = $region40
        $region39: #{tpu_custom_call.1} parent=31 // pred_region
          %274 = dma.done %s266, 128
        $region40: #{tpu_custom_call.1} parent=31 // pred_fallthru
          _
        %s275 = sand.u32 %s28, 1
        %s276 = scalar_lea.sflag [#allocation6], %s275
        %s277 = sand.u32 %s102, 1
        %s278 = smul.addr %s277, 8
        %s279 = scalar_lea.vmem [#allocation7], %s278
        // Predicated region
        $region41: #{tpu_custom_call.1} parent=31 // pred_check
          %p280 = pneg %p115
        $region42: #{tpu_custom_call.1} parent=31 // pred_check_branch
          %282 = sbr.rel (%p280) target = $region44
        $region43: #{tpu_custom_call.1} parent=31 // pred_region
          %284 = dma.done %s276, 128
        $region44: #{tpu_custom_call.1} parent=31 // pred_fallthru
          _
        %s285 = sand.u32 %s50, 1
        %s286 = scalar_lea.sflag [#allocation3], %s285
        %s287 = sand.u32 %s50, 1
        %s288 = smul.addr %s287, 8
        %s289 = scalar_lea.vmem [#allocation2], %s288
        %p290 = pneg %p63
        %p291 = pneg %p60
        %s292 = sand.u32 %s28, 1
        %s293 = scalar_lea.sflag [#allocation6], %s292
        %s294 = sand.u32 %s76, 1
        %s295 = smul.addr %s294, 8
        %s296 = scalar_lea.vmem [#allocation5], %s295
        %p297 = pneg %p89
        %p298 = pneg %p86
        %s299 = sand.u32 %s28, 1
        %s300 = scalar_lea.sflag [#allocation6], %s299
        %s301 = sand.u32 %s102, 1
        %s302 = smul.addr %s301, 8
        %s303 = scalar_lea.vmem [#allocation7], %s302
        %p304 = pneg %p115
        %p305 = pneg %p112
        %p306 = pneg %p143
        %p307 = pneg %p140
        %s308 = sand.u32 %s130, 1
        %s309 = scalar_lea.sflag [#allocation4], %s308
        %s310 = sand.u32 %s130, 1
        %s311 = smul.addr %s310, 8
        %s312 = scalar_lea.vmem [#allocation8], %s311
        %p313 = pneg %p171
        %p314 = pneg %p168
        %s315 = sand.u32 %s158, 1
        %s316 = scalar_lea.sflag [#allocation10], %s315
        %s317 = sand.u32 %s158, 1
        %s318 = smul.addr %s317, 8
        %s319 = scalar_lea.vmem [#allocation9], %s318
        %v320 = vld [vmem:[%s259] sm:$0xff]
        %v321 = vld [vmem:[%s269] sm:$0xff]
        %v322 = vld [vmem:[%s279] sm:$0xff]
        %vm323 = vcmask 261120
        %v325 = vsel %vm323, %v320, 0
        %v328 = vsel %vm323, %v321, 0
        %330 = vmatpush.xpose.msra.mxu0 0.0
        %331 = vmatpush.xpose.msra.mxu0 0.0
        %332 = vmatpush.xpose.msra.mxu0 0.0
        %333 = vmatpush.xpose.msra.mxu0 0.0
        %334 = vmatpush.xpose.msra.mxu0 0.0
        %335 = vmatpush.xpose.msra.mxu0 0.0
        %336 = vmatpush.xpose.msra.mxu0 0.0
        %337 = vmatpush.xpose.msra.mxu0 0.0
        %338 = vmatpush.xpose.msra.mxu0 0.0
        %339 = vmatpush.xpose.msra.mxu0 0.0
        %340 = vmatpush.xpose.msra.mxu0 0.0
        %341 = vmatpush.xpose.msra.mxu0 0.0
        %342 = vmatpush.xpose.msra.mxu0 0.0
        %343 = vmatpush.xpose.msra.mxu0 0.0
        %344 = vmatpush.xpose.msra.mxu0 0.0
        %345 = vmatpush.xpose.msra.mxu0 %v328
        %346 = vmatmul.f32.gmra.mxu0 %v325
        %v347 = vpop.f32.mrf.mxu0
        %v348 = vadd.f32 0.0, %v347
        %349 = vdwg.mxu0
        %v350 = vmul.f32 %v348, 0.17677669
        %vm351 = vcmask 64512
        %v352 = vsel %vm351, %v350, -inf
        %353 = vmax.xlane.f32.xlu0 %v352
        %v354 = vpop.xlane.xlu0 %353
        %v355 = vsub.f32 %v350, %v354
        %v356 = vmul.f32 %v355, 1.442695
        %v357 = vpow.pop %v356
        %v358 = vsel %vm351, %v357, 0.0
        %359 = vadd.xlane.f32.xlu0 %v358
        %v360 = vpop.xlane.xlu0 %359
        %v361 = vrcp.pop %v360
        %v362 = vmul.f32 %v360, %v361
        %v363 = vsub.f32 1.0, %v362
        %v364 = vmul.f32 %v361, %v363
        %v365 = vadd.f32 %v361, %v364
        %vm366 = vweird.f32 %v360
        %vm367 = vweird.f32 %v361
        %vm368 = vmor %vm366, %vm367
        %v369 = vsel %vm368, %v361, %v365
        %v370 = vand.u32 2147483647, %v360
        %vm371 = vcmp.eq.f32.partialorder %v370, 8.507059e+37
        %v372 = vand.u32 %v360, 2147483648
        %v373 = vor.u32 1.1754944e-38, %v372
        %v374 = vsel %vm371, %v373, %v369
        %v375 = vmul.f32 %v357, %v374
        %376 = vst.msk [vmem:[%s312] sm:$0xff] %vm351, %v375
        %v378 = vsel %vm351, %v375, 0
        %380 = vmatpush.msra.mxu0 0.0
        %381 = vmatpush.msra.mxu0 0.0
        %382 = vmatpush.msra.mxu0 0.0
        %383 = vmatpush.msra.mxu0 0.0
        %384 = vmatpush.msra.mxu0 0.0
        %385 = vmatpush.msra.mxu0 0.0
        %386 = vmatpush.msra.mxu0 0.0
        %387 = vmatpush.msra.mxu0 0.0
        %388 = vmatpush.msra.mxu0 0.0
        %389 = vmatpush.msra.mxu0 0.0
        %390 = vmatpush.msra.mxu0 0.0
        %391 = vmatpush.msra.mxu0 0.0
        %392 = vmatpush.msra.mxu0 0.0
        %393 = vmatpush.msra.mxu0 0.0
        %394 = vmatpush.msra.mxu0 0.0
        %395 = vmatpush.msra.mxu0 %v322
        %396 = vmatmul.f32.gmra.mxu0 %v378
        %v397 = vpop.f32.mrf.mxu0
        %v398 = vadd.f32 0.0, %v397
        %399 = vdwg.mxu0
        %400 = vst.msk [vmem:[%s319] sm:$0xff] %vm323, %v398
        %s401 = sand.u32 %s130, 1
        %s402 = scalar_lea.sflag [#allocation4], %s401
        %s403 = sand.u32 %s130, 1
        %s404 = smul.addr %s403, 8
        %s405 = scalar_lea.vmem [#allocation8], %s404
        %s406 = sand.u32 %s158, 1
        %s407 = scalar_lea.sflag [#allocation10], %s406
        %s408 = sand.u32 %s158, 1
        %s409 = smul.addr %s408, 8
        %s410 = scalar_lea.vmem [#allocation9], %s409
        // Predicated region
        $region45: #{tpu_custom_call.1} parent=31 // pred_check
          %p411 = pneg %p140
        $region46: #{tpu_custom_call.1} parent=31 // pred_check_branch
          %413 = sbr.rel (%p411) target = $region48
        $region47: #{tpu_custom_call.1} parent=31 // pred_region
          %415 = vsyncadd %s402, 0
          %s416 = sadd.s32 %s33, %s32
          %s417 = smul.addr %s416, 8
          %s418 = scalar_lea.hbm %s3, %s417
          %s420 = sshll.u32 %s405, 4
          %s421 = int_to_ptr.vmem [resolvable:$true] %s420
          %s422 = sshll.u32 %s418, 4
          %s423 = int_to_ptr.hbm [resolvable:$true] %s422
          %425 = dma.vmem_to_hbm [thread:$0]  %s421, 128, %s423, %s402
        $region48: #{tpu_custom_call.1} parent=31 // pred_fallthru
          _
        // Predicated region
        $region49: #{tpu_custom_call.1} parent=31 // pred_check
          %p426 = pneg %p168
        $region50: #{tpu_custom_call.1} parent=31 // pred_check_branch
          %428 = sbr.rel (%p426) target = $region52
        $region51: #{tpu_custom_call.1} parent=31 // pred_region
          %430 = vsyncadd %s407, 0
          %s431 = sadd.s32 %s33, %s32
          %s432 = smul.addr %s431, 8
          %s433 = scalar_lea.hbm %s4, %s432
          %s435 = sshll.u32 %s410, 4
          %s436 = int_to_ptr.vmem [resolvable:$true] %s435
          %s437 = sshll.u32 %s433, 4
          %s438 = int_to_ptr.hbm [resolvable:$true] %s437
          %440 = dma.vmem_to_hbm [thread:$0]  %s436, 128, %s438, %s407
        $region52: #{tpu_custom_call.1} parent=31 // pred_fallthru
          _
      $region32: #{tpu_custom_call.1} parent=5 // pred_fallthru
        _
      %p441 = scmp.le.s32.totalorder 2, %s23
      // Predicated region
      $region53: #{tpu_custom_call.1} parent=5 // pred_check
        %p442 = pneg %p441
      $region54: #{tpu_custom_call.1} parent=5 // pred_check_branch
        %444 = sbr.rel (%p442) target = $region56
      $region55: #{tpu_custom_call.1} parent=5 // pred_region
        %s445 = ssub.s32 %s23, 2
        // Predicated region
        $region57: #{tpu_custom_call.1} parent=55 // pred_check
          %p446 = pneg %p146
        $region58: #{tpu_custom_call.1} parent=55 // pred_check_branch
          %448 = sbr.rel (%p446) target = $region60
        $region59: #{tpu_custom_call.1} parent=55 // pred_region
          %s449 = sand.u32 %s131, 1
          %s450 = scalar_lea.sflag [#allocation4], %s449
          %s451 = sand.u32 %s131, 1
          %s452 = smul.addr %s451, 8
          %s453 = scalar_lea.vmem [#allocation8], %s452
          %455 = dma.done %s450, 128
        $region60: #{tpu_custom_call.1} parent=55 // pred_fallthru
          _
        // Predicated region
        $region61: #{tpu_custom_call.1} parent=55 // pred_check
          %p456 = pneg %p174
        $region62: #{tpu_custom_call.1} parent=55 // pred_check_branch
          %458 = sbr.rel (%p456) target = $region64
        $region63: #{tpu_custom_call.1} parent=55 // pred_region
          %s459 = sand.u32 %s159, 1
          %s460 = scalar_lea.sflag [#allocation10], %s459
          %s461 = sand.u32 %s159, 1
          %s462 = smul.addr %s461, 8
          %s463 = scalar_lea.vmem [#allocation9], %s462
          %465 = dma.done %s460, 128
        $region64: #{tpu_custom_call.1} parent=55 // pred_fallthru
          _
      $region56: #{tpu_custom_call.1} parent=5 // pred_fallthru
        _
    $region6: #{tpu_custom_call.1} parent=1 // loop_footer
      %s27 = sadd.s32 1, %s23
    $region7: #{tpu_custom_call.1} parent=1 // loop_footer_branch
      %22 = sbr.rel target = $region3
    $region8: #{tpu_custom_call.1} parent=1 // loop_exit
      _
    %466 = vsyncpa [#allocation3], 1
    %s467 = scalar_lea.sflag [#allocation3], 1
    %468 = vsyncpa %s467, 1
    %469 = vsyncpa [#allocation6], 1
    %s470 = scalar_lea.sflag [#allocation6], 1
    %471 = vsyncpa %s470, 1
    %472 = vsyncpa [#allocation4], 1
    %s473 = scalar_lea.sflag [#allocation4], 1
    %474 = vsyncpa %s473, 1
    %475 = vsyncpa [#allocation10], 1
    %s476 = scalar_lea.sflag [#allocation10], 1
    %477 = vsyncpa %s476, 1

</llo_original>
